<compile_context>
chip_gen: v7x
topology: tpu7x:2x2x1
jax: 0.10.0
libtpu: 0.0.40
codegen_flags: <defaults>
</compile_context>

<pallas_src>
import functools

import jax
import jax.numpy as jnp
from jax.experimental import pallas as pl
from jax.experimental.pallas import tpu as pltpu


# ----------------------------------------------------------------------------
# Fused VAE forward kernel (one batch tile per grid step)
# ----------------------------------------------------------------------------
def vae_fused_kernel(x_ref, eps_ref,
                     w_e1, b_e1, w_e2, b_e2,
                     w_mv, b_mv,
                     w_d1, b_d1, w_d2, b_d2,
                     xhat_ref, mv_ref, *, latent_dim):
    cdt = w_e1.dtype                       # MXU operand dtype (bf16 by default)

    # ---- encoder: Linear+ReLU, Linear+ReLU (bf16 MXU, f32 accumulate) -----
    h = jnp.dot(x_ref[...], w_e1[...], preferred_element_type=jnp.float32)
    h = jnp.maximum(h + b_e1[...], 0.0)
    h = jnp.dot(h.astype(cdt), w_e2[...], preferred_element_type=jnp.float32)
    h = jnp.maximum(h + b_e2[...], 0.0)

    # ---- merged mean/var head: one lane-dense [rows, 2*latent] matmul -----
    mv = jnp.dot(h.astype(cdt), w_mv[...],
                 preferred_element_type=jnp.float32) + b_mv[...]
    mv_ref[...] = mv.astype(mv_ref.dtype)              # lane-dense 128-wide store

    # ---- reparameterize on full 128-wide vregs (no mid-vreg slices) --------
    # mv = [mu | logvar]; rolling by latent_dim swaps the halves -> [logvar | mu]
    # (swap is symmetric since mv width == 2*latent_dim, so roll direction is
    # irrelevant).  eps_ref is lane-padded: [eps | 0].
    swapped = pltpu.roll(mv, shift=latent_dim, axis=1)
    z_full = mv + jnp.exp(0.5 * swapped) * eps_ref[...]
    # lanes [0, latent) of z_full hold z; the upper lanes hold logvar (finite)
    # and are killed by the zero-padded rows of w_d1 below.

    # ---- decoder: Linear+ReLU, Linear+Sigmoid ------------------------------
    d = jnp.dot(z_full.astype(cdt), w_d1[...],
                preferred_element_type=jnp.float32)
    d = jnp.maximum(d + b_d1[...], 0.0)
    y = jnp.dot(d.astype(cdt), w_d2[...],
                preferred_element_type=jnp.float32) + b_d2[...]
    # sigmoid: exp on the EUP, approximate reciprocal on the EUP slot too
    xhat_ref[...] = pl.reciprocal(1.0 + jnp.exp(-y),
                                  approx=True).astype(xhat_ref.dtype)


# ----------------------------------------------------------------------------
# Batch-tile selection
# ----------------------------------------------------------------------------
def _round_up(n, m):
    return ((n + m - 1) // m) * m


def _pick_block_rows(B, max_rows):
    """Pick the batch tile: big (amortize ~0.35us/step), >=2 grid steps for
    megacore when possible, multiple of 256 for the MXU when large enough."""
    if B <= 8:
        return B                             # single tiny tile (full-dim block)
    bm = min(max_rows, _round_up(-(-B // 2), 8))   # aim for >= 2 grid steps
    bm = max(8, (bm // 8) * 8)                     # sublane-aligned
    if bm >= 256:
        bm = (bm // 256) * 256                     # MXU-row-friendly
    return bm


# ----------------------------------------------------------------------------
# Wrapper
# ----------------------------------------------------------------------------
def vae_forward(params, x, eps, *, block_rows=1024):
    """Returns (x_hat, mu, logvar) — semantics of VAE.forward."""
    B, input_dim = x.shape
    latent_dim = eps.shape[1]
    hidden_dim = params["w_e1"].shape[1]

    bm = _pick_block_rows(B, block_rows)
    grid_m = pl.cdiv(B, bm)
    B_pad = grid_m * bm

    cdt = params["w_e1"].dtype               # compute dtype for MXU operands
    x_c = x.astype(cdt)
    # lane-pad eps to 2*latent so the reparam works on full 128-wide vregs
    eps_pad = jnp.concatenate([eps, jnp.zeros_like(eps)], axis=1)
    if B_pad != B:                            # row-pad to a whole number of tiles
        x_c = jnp.pad(x_c, ((0, B_pad - B), (0, 0)))
        eps_pad = jnp.pad(eps_pad, ((0, B_pad - B), (0, 0)))

    def rows(cols):
        # batch-tiled operand: block index i along rows, full width in lanes
        return pl.BlockSpec((bm, cols), lambda i: (i, 0))

    def const(arr):
        # grid-invariant operand: constant index_map -> DMA'd once, VMEM-resident
        return pl.BlockSpec(arr.shape, lambda i: (0, 0))

    kernel = functools.partial(vae_fused_kernel, latent_dim=latent_dim)

    # Advisory cost estimate for XLA's scheduler around the custom call.
    flops = 2 * B_pad * (input_dim * hidden_dim + hidden_dim * hidden_dim
                         + hidden_dim * 2 * latent_dim
                         + 2 * latent_dim * hidden_dim
                         + hidden_dim * input_dim)
    weight_bytes = sum(int(v.size) * v.dtype.itemsize for v in params.values())
    bytes_accessed = (int(x_c.size) * x_c.dtype.itemsize
                      + int(eps_pad.size) * eps_pad.dtype.itemsize
                      + weight_bytes
                      + B_pad * input_dim * 4            # x_hat (f32)
                      + B_pad * 2 * latent_dim * 4)      # mv (f32)
    cost = pl.CostEstimate(
        flops=int(flops),
        transcendentals=int(B_pad * (2 * latent_dim + input_dim)),
        bytes_accessed=int(bytes_accessed))

    x_hat, mv = pl.pallas_call(
        kernel,
        grid=(grid_m,),
        out_shape=(
            jax.ShapeDtypeStruct((B_pad, input_dim), jnp.float32),
            jax.ShapeDtypeStruct((B_pad, 2 * latent_dim), jnp.float32),
        ),
        in_specs=[
            rows(input_dim),                # x  (bf16)
            rows(2 * latent_dim),           # eps, lane-padded (f32)
            const(params["w_e1"]), const(params["b_e1"]),
            const(params["w_e2"]), const(params["b_e2"]),
            const(params["w_mv"]), const(params["b_mv"]),
            const(params["w_d1"]), const(params["b_d1"]),
            const(params["w_d2"]), const(params["b_d2"]),
        ],
        out_specs=(rows(input_dim), rows(2 * latent_dim)),
        compiler_params=pltpu.CompilerParams(
            dimension_semantics=("parallel",),        # batch tiles -> megacore
            vmem_limit_bytes=32 * 1024 * 1024),       # safe on v5e/v6e/v7x
        cost_estimate=cost,
    )(x_c, eps_pad,
      params["w_e1"], params["b_e1"], params["w_e2"], params["b_e2"],
      params["w_mv"], params["b_mv"],
      params["w_d1"], params["b_d1"], params["w_d2"], params["b_d2"])

    mu = mv[:B, :latent_dim]
    logvar = mv[:B, latent_dim:]
    return x_hat[:B], mu, logvar


# ----------------------------------------------------------------------------
# Parameter construction (PyTorch-Linear-style init, stored pre-transposed,
# weights in the MXU compute dtype, biases in f32)
# ----------------------------------------------------------------------------
def init_linear(key, in_dim, out_dim, dtype):
    kw, kb = jax.random.split(key)
    bound = 1.0 / jnp.sqrt(in_dim)
    # nn.Linear stores [out, in]; we keep it pre-transposed as [in, out]
    w_t = jax.random.uniform(kw, (out_dim, in_dim), jnp.float32, -bound, bound).T
    b = jax.random.uniform(kb, (1, out_dim), jnp.float32, -bound, bound)
    return w_t.astype(dtype), b


def make_params(key, input_dim, hidden_dim, latent_dim, dtype=jnp.bfloat16):
    keys = jax.random.split(key, 6)
    w_e1, b_e1 = init_linear(keys[0], input_dim, hidden_dim, dtype)
    w_e2, b_e2 = init_linear(keys[1], hidden_dim, hidden_dim, dtype)
    w_mu, b_mu = init_linear(keys[2], hidden_dim, latent_dim, dtype)
    w_lv, b_lv = init_linear(keys[3], hidden_dim, latent_dim, dtype)
    w_d1, b_d1 = init_linear(keys[4], latent_dim, hidden_dim, dtype)
    w_d2, b_d2 = init_linear(keys[5], hidden_dim, input_dim, dtype)
    # merge mean/var heads into one lane-dense [hidden, 2*latent] weight
    w_mv = jnp.concatenate([w_mu, w_lv], axis=1)
    b_mv = jnp.concatenate([b_mu, b_lv], axis=1)
    # zero-pad w_d1's K dim (latent -> 2*latent) so the kernel's 128-wide
    # z_full (z in lanes [0,latent), don't-care above) matmuls correctly
    w_d1 = jnp.concatenate([w_d1, jnp.zeros_like(w_d1)], axis=0)
    return {
        "w_e1": w_e1, "b_e1": b_e1,
        "w_e2": w_e2, "b_e2": b_e2,
        "w_mv": w_mv, "b_mv": b_mv,
        "w_d1": w_d1, "b_d1": b_d1,
        "w_d2": w_d2, "b_d2": b_d2,
    }


# ----------------------------------------------------------------------------
# Pure-JAX reference mirroring the kernel's dtype policy (bf16 MXU, f32 acc)
# ----------------------------------------------------------------------------
def ref_forward(params, x, eps, latent_dim):
    cdt = params["w_e1"].dtype

    def lin(a, w, b):
        return jnp.dot(a.astype(cdt), w, preferred_element_type=jnp.float32) + b

    h = jnp.maximum(lin(x, params["w_e1"], params["b_e1"]), 0.0)
    h = jnp.maximum(lin(h, params["w_e2"], params["b_e2"]), 0.0)
    mv = lin(h, params["w_mv"], params["b_mv"])
    mu, lv = mv[:, :latent_dim], mv[:, latent_dim:]
    z = mu + jnp.exp(0.5 * lv) * eps
    # stored w_d1 is K-padded; the real weight is its first `latent_dim` rows
    d = jnp.maximum(lin(z, params["w_d1"][:latent_dim], params["b_d1"]), 0.0)
    y = lin(d, params["w_d2"], params["b_d2"])
    return jax.nn.sigmoid(y), mu, lv


# ----------------------------------------------------------------------------
# Main
# ----------------------------------------------------------------------------
if __name__ == "__main__":
    INPUT, HIDDEN, LATENT = 256, 128, 64

    root = jax.random.PRNGKey(0)
    k_params, k_x, k_eps = jax.random.split(root, 3)
    params = make_params(k_params, INPUT, HIDDEN, LATENT)

    fwd = jax.jit(vae_forward)

    # B=8  : tiny batch, single tile (canonical small-shape check)
    # B=200: non-multiple batch -> cdiv grid of 2 padded tiles (megacore path)
    for B in (8, 200):
        kx = jax.random.fold_in(k_x, B)
        keps = jax.random.fold_in(k_eps, B)
        x = jax.random.uniform(kx, (B, INPUT), jnp.float32)     # [batch, features]
        eps = jax.random.normal(keps, (B, LATENT), jnp.float32)  # torch.randn_like

        x_hat, mu, logvar = fwd(params, x, eps)
        jax.block_until_ready((x_hat, mu, logvar))

        x_hat_r, mu_r, lv_r = ref_forward(params, x, eps, LATENT)

        assert x_hat.shape == (B, INPUT)
        assert mu.shape == (B, LATENT) and logvar.shape == (B, LATENT)
        assert bool(jnp.all(jnp.isfinite(x_hat)))
        assert jnp.allclose(mu, mu_r, atol=1e-3), \
            float(jnp.max(jnp.abs(mu - mu_r)))
        assert jnp.allclose(logvar, lv_r, atol=1e-3), \
            float(jnp.max(jnp.abs(logvar - lv_r)))
        # x_hat tolerance covers the approx-reciprocal sigmoid in the kernel
        assert jnp.allclose(x_hat, x_hat_r, atol=5e-3), \
            float(jnp.max(jnp.abs(x_hat - x_hat_r)))

    print("KERNEL_OK")
</pallas_src>

<mosaic_0001>
module attributes {stable_mosaic.version = 11 : i64} {
  func.func @vae_fused_kernel(%arg0: i32, %arg1: memref<8x256xbf16, #tpu.memory_space<vmem>>, %arg2: memref<8x128xf32, #tpu.memory_space<vmem>>, %arg3: memref<256x128xbf16, #tpu.memory_space<vmem>>, %arg4: memref<1x128xf32, #tpu.memory_space<vmem>>, %arg5: memref<128x128xbf16, #tpu.memory_space<vmem>>, %arg6: memref<1x128xf32, #tpu.memory_space<vmem>>, %arg7: memref<128x128xbf16, #tpu.memory_space<vmem>>, %arg8: memref<1x128xf32, #tpu.memory_space<vmem>>, %arg9: memref<128x128xbf16, #tpu.memory_space<vmem>>, %arg10: memref<1x128xf32, #tpu.memory_space<vmem>>, %arg11: memref<128x256xbf16, #tpu.memory_space<vmem>>, %arg12: memref<1x256xf32, #tpu.memory_space<vmem>>, %arg13: memref<8x256xf32, #tpu.memory_space<vmem>>, %arg14: memref<8x128xf32, #tpu.memory_space<vmem>>) attributes {dimension_semantics = [#tpu.dimension_semantics<parallel>], iteration_bounds = array<i64: 1>, scalar_prefetch = 0 : i64, scratch_operands = 0 : i64, tpu.core_type = #tpu.core_type<tc>, window_params = [{transform_indices = @transform_0, window_bounds = array<i64: 8, 256>}, {transform_indices = @transform_1, window_bounds = array<i64: 8, 128>}, {pipeline_mode = #tpu.pipeline_mode<synchronous>, transform_indices = @transform_2, window_bounds = array<i64: 256, 128>}, {pipeline_mode = #tpu.pipeline_mode<synchronous>, transform_indices = @transform_3, window_bounds = array<i64: 1, 128>}, {pipeline_mode = #tpu.pipeline_mode<synchronous>, transform_indices = @transform_4, window_bounds = array<i64: 128, 128>}, {pipeline_mode = #tpu.pipeline_mode<synchronous>, transform_indices = @transform_5, window_bounds = array<i64: 1, 128>}, {pipeline_mode = #tpu.pipeline_mode<synchronous>, transform_indices = @transform_6, window_bounds = array<i64: 128, 128>}, {pipeline_mode = #tpu.pipeline_mode<synchronous>, transform_indices = @transform_7, window_bounds = array<i64: 1, 128>}, {pipeline_mode = #tpu.pipeline_mode<synchronous>, transform_indices = @transform_8, window_bounds = array<i64: 128, 128>}, {pipeline_mode = #tpu.pipeline_mode<synchronous>, transform_indices = @transform_9, window_bounds = array<i64: 1, 128>}, {pipeline_mode = #tpu.pipeline_mode<synchronous>, transform_indices = @transform_10, window_bounds = array<i64: 128, 256>}, {pipeline_mode = #tpu.pipeline_mode<synchronous>, transform_indices = @transform_11, window_bounds = array<i64: 1, 256>}, {transform_indices = @transform_12, window_bounds = array<i64: 8, 256>}, {transform_indices = @transform_13, window_bounds = array<i64: 8, 128>}]} {
    %c0 = arith.constant 0 : index
    %c0_0 = arith.constant 0 : index
    %0 = vector.load %arg1[%c0, %c0_0] : memref<8x256xbf16, #tpu.memory_space<vmem>>, vector<8x256xbf16>
    %c0_1 = arith.constant 0 : index
    %c0_2 = arith.constant 0 : index
    %1 = vector.load %arg3[%c0_1, %c0_2] : memref<256x128xbf16, #tpu.memory_space<vmem>>, vector<256x128xbf16>
    %cst = arith.constant dense<0.000000e+00> : vector<8x128xf32>
    %2 = tpu.matmul %0, %1, %cst {dimension_numbers = #tpu.dot_dimension_numbers<[1], [0], [0], [1], [0, 0, 1, 1], [], []>} : vector<8x256xbf16>, vector<256x128xbf16>, vector<8x128xf32> -> vector<8x128xf32>
    %c0_3 = arith.constant 0 : index
    %c0_4 = arith.constant 0 : index
    %3 = vector.load %arg4[%c0_3, %c0_4] : memref<1x128xf32, #tpu.memory_space<vmem>>, vector<1x128xf32>
    %4 = vector.broadcast %3 : vector<1x128xf32> to vector<8x128xf32>
    %5 = arith.addf %2, %4 : vector<8x128xf32>
    %cst_5 = arith.constant 0.000000e+00 : f32
    %6 = vector.broadcast %cst_5 : f32 to vector<8x128xf32>
    %7 = arith.maximumf %5, %6 : vector<8x128xf32>
    %8 = arith.truncf %7 : vector<8x128xf32> to vector<8x128xbf16>
    %c0_6 = arith.constant 0 : index
    %c0_7 = arith.constant 0 : index
    %9 = vector.load %arg5[%c0_6, %c0_7] : memref<128x128xbf16, #tpu.memory_space<vmem>>, vector<128x128xbf16>
    %cst_8 = arith.constant dense<0.000000e+00> : vector<8x128xf32>
    %10 = tpu.matmul %8, %9, %cst_8 {dimension_numbers = #tpu.dot_dimension_numbers<[1], [0], [0], [1], [0, 0, 1, 1], [], []>} : vector<8x128xbf16>, vector<128x128xbf16>, vector<8x128xf32> -> vector<8x128xf32>
    %c0_9 = arith.constant 0 : index
    %c0_10 = arith.constant 0 : index
    %11 = vector.load %arg6[%c0_9, %c0_10] : memref<1x128xf32, #tpu.memory_space<vmem>>, vector<1x128xf32>
    %12 = vector.broadcast %11 : vector<1x128xf32> to vector<8x128xf32>
    %13 = arith.addf %10, %12 : vector<8x128xf32>
    %cst_11 = arith.constant 0.000000e+00 : f32
    %14 = vector.broadcast %cst_11 : f32 to vector<8x128xf32>
    %15 = arith.maximumf %13, %14 : vector<8x128xf32>
    %16 = arith.truncf %15 : vector<8x128xf32> to vector<8x128xbf16>
    %c0_12 = arith.constant 0 : index
    %c0_13 = arith.constant 0 : index
    %17 = vector.load %arg7[%c0_12, %c0_13] : memref<128x128xbf16, #tpu.memory_space<vmem>>, vector<128x128xbf16>
    %cst_14 = arith.constant dense<0.000000e+00> : vector<8x128xf32>
    %18 = tpu.matmul %16, %17, %cst_14 {dimension_numbers = #tpu.dot_dimension_numbers<[1], [0], [0], [1], [0, 0, 1, 1], [], []>} : vector<8x128xbf16>, vector<128x128xbf16>, vector<8x128xf32> -> vector<8x128xf32>
    %c0_15 = arith.constant 0 : index
    %c0_16 = arith.constant 0 : index
    %19 = vector.load %arg8[%c0_15, %c0_16] : memref<1x128xf32, #tpu.memory_space<vmem>>, vector<1x128xf32>
    %20 = vector.broadcast %19 : vector<1x128xf32> to vector<8x128xf32>
    %21 = arith.addf %18, %20 : vector<8x128xf32>
    %c0_17 = arith.constant 0 : index
    %c0_18 = arith.constant 0 : index
    %22 = vector.load %arg14[%c0_17, %c0_18] : memref<8x128xf32, #tpu.memory_space<vmem>>, vector<8x128xf32>
    tpu.vector_store %arg14[%c0_17, %c0_18], %21 {strides = array<i32>} : memref<8x128xf32, #tpu.memory_space<vmem>>, vector<8x128xf32>,
    %c64_i32 = arith.constant 64 : i32
    %23 = tpu.dynamic_rotate %21 by %c64_i32 dim 1 : vector<8x128xf32>, i32 -> vector<8x128xf32>
    %cst_19 = arith.constant 5.000000e-01 : f32
    %24 = vector.broadcast %cst_19 : f32 to vector<8x128xf32>
    %25 = arith.mulf %24, %23 : vector<8x128xf32>
    %26 = math.exp %25 : vector<8x128xf32>
    %c0_20 = arith.constant 0 : index
    %c0_21 = arith.constant 0 : index
    %27 = vector.load %arg2[%c0_20, %c0_21] : memref<8x128xf32, #tpu.memory_space<vmem>>, vector<8x128xf32>
    %28 = arith.mulf %26, %27 : vector<8x128xf32>
    %29 = arith.addf %21, %28 : vector<8x128xf32>
    %30 = arith.truncf %29 : vector<8x128xf32> to vector<8x128xbf16>
    %c0_22 = arith.constant 0 : index
    %c0_23 = arith.constant 0 : index
    %31 = vector.load %arg9[%c0_22, %c0_23] : memref<128x128xbf16, #tpu.memory_space<vmem>>, vector<128x128xbf16>
    %cst_24 = arith.constant dense<0.000000e+00> : vector<8x128xf32>
    %32 = tpu.matmul %30, %31, %cst_24 {dimension_numbers = #tpu.dot_dimension_numbers<[1], [0], [0], [1], [0, 0, 1, 1], [], []>} : vector<8x128xbf16>, vector<128x128xbf16>, vector<8x128xf32> -> vector<8x128xf32>
    %c0_25 = arith.constant 0 : index
    %c0_26 = arith.constant 0 : index
    %33 = vector.load %arg10[%c0_25, %c0_26] : memref<1x128xf32, #tpu.memory_space<vmem>>, vector<1x128xf32>
    %34 = vector.broadcast %33 : vector<1x128xf32> to vector<8x128xf32>
    %35 = arith.addf %32, %34 : vector<8x128xf32>
    %cst_27 = arith.constant 0.000000e+00 : f32
    %36 = vector.broadcast %cst_27 : f32 to vector<8x128xf32>
    %37 = arith.maximumf %35, %36 : vector<8x128xf32>
    %38 = arith.truncf %37 : vector<8x128xf32> to vector<8x128xbf16>
    %c0_28 = arith.constant 0 : index
    %c0_29 = arith.constant 0 : index
    %39 = vector.load %arg11[%c0_28, %c0_29] : memref<128x256xbf16, #tpu.memory_space<vmem>>, vector<128x256xbf16>
    %cst_30 = arith.constant dense<0.000000e+00> : vector<8x256xf32>
    %40 = tpu.matmul %38, %39, %cst_30 {dimension_numbers = #tpu.dot_dimension_numbers<[1], [0], [0], [1], [0, 0, 1, 1], [], []>} : vector<8x128xbf16>, vector<128x256xbf16>, vector<8x256xf32> -> vector<8x256xf32>
    %c0_31 = arith.constant 0 : index
    %c0_32 = arith.constant 0 : index
    %41 = vector.load %arg12[%c0_31, %c0_32] : memref<1x256xf32, #tpu.memory_space<vmem>>, vector<1x256xf32>
    %42 = vector.broadcast %41 : vector<1x256xf32> to vector<8x256xf32>
    %43 = arith.addf %40, %42 : vector<8x256xf32>
    %cst_33 = arith.constant 0.000000e+00 : f32
    %44 = vector.broadcast %cst_33 : f32 to vector<8x256xf32>
    %45 = arith.subf %44, %43 : vector<8x256xf32>
    %46 = math.exp %45 : vector<8x256xf32>
    %cst_34 = arith.constant 1.000000e+00 : f32
    %47 = vector.broadcast %cst_34 : f32 to vector<8x256xf32>
    %48 = arith.addf %47, %46 : vector<8x256xf32>
    %49 = tpu.reciprocal %48 {approx = true} : vector<8x256xf32> -> vector<8x256xf32>
    %c0_35 = arith.constant 0 : index
    %c0_36 = arith.constant 0 : index
    %50 = vector.load %arg13[%c0_35, %c0_36] : memref<8x256xf32, #tpu.memory_space<vmem>>, vector<8x256xf32>
    tpu.vector_store %arg13[%c0_35, %c0_36], %49 {strides = array<i32>} : memref<8x256xf32, #tpu.memory_space<vmem>>, vector<8x256xf32>,
    return
  }
  func.func @transform_0(%arg0: i32) -> (i32, i32) {
    %c0_i32 = arith.constant 0 : i32
    %c0_i32_0 = arith.constant 0 : i32
    return %arg0, %c0_i32 : i32, i32
  }
  func.func @transform_1(%arg0: i32) -> (i32, i32) {
    %c0_i32 = arith.constant 0 : i32
    %c0_i32_0 = arith.constant 0 : i32
    return %arg0, %c0_i32 : i32, i32
  }
  func.func @transform_2(%arg0: i32) -> (i32, i32) {
    %c0_i32 = arith.constant 0 : i32
    %c0_i32_0 = arith.constant 0 : i32
    %c0_i32_1 = arith.constant 0 : i32
    return %c0_i32, %c0_i32_0 : i32, i32
  }
  func.func @transform_3(%arg0: i32) -> (i32, i32) {
    %c0_i32 = arith.constant 0 : i32
    %c0_i32_0 = arith.constant 0 : i32
    %c0_i32_1 = arith.constant 0 : i32
    return %c0_i32, %c0_i32_0 : i32, i32
  }
  func.func @transform_4(%arg0: i32) -> (i32, i32) {
    %c0_i32 = arith.constant 0 : i32
    %c0_i32_0 = arith.constant 0 : i32
    %c0_i32_1 = arith.constant 0 : i32
    return %c0_i32, %c0_i32_0 : i32, i32
  }
  func.func @transform_5(%arg0: i32) -> (i32, i32) {
    %c0_i32 = arith.constant 0 : i32
    %c0_i32_0 = arith.constant 0 : i32
    %c0_i32_1 = arith.constant 0 : i32
    return %c0_i32, %c0_i32_0 : i32, i32
  }
  func.func @transform_6(%arg0: i32) -> (i32, i32) {
    %c0_i32 = arith.constant 0 : i32
    %c0_i32_0 = arith.constant 0 : i32
    %c0_i32_1 = arith.constant 0 : i32
    return %c0_i32, %c0_i32_0 : i32, i32
  }
  func.func @transform_7(%arg0: i32) -> (i32, i32) {
    %c0_i32 = arith.constant 0 : i32
    %c0_i32_0 = arith.constant 0 : i32
    %c0_i32_1 = arith.constant 0 : i32
    return %c0_i32, %c0_i32_0 : i32, i32
  }
  func.func @transform_8(%arg0: i32) -> (i32, i32) {
    %c0_i32 = arith.constant 0 : i32
    %c0_i32_0 = arith.constant 0 : i32
    %c0_i32_1 = arith.constant 0 : i32
    return %c0_i32, %c0_i32_0 : i32, i32
  }
  func.func @transform_9(%arg0: i32) -> (i32, i32) {
    %c0_i32 = arith.constant 0 : i32
    %c0_i32_0 = arith.constant 0 : i32
    %c0_i32_1 = arith.constant 0 : i32
    return %c0_i32, %c0_i32_0 : i32, i32
  }
  func.func @transform_10(%arg0: i32) -> (i32, i32) {
    %c0_i32 = arith.constant 0 : i32
    %c0_i32_0 = arith.constant 0 : i32
    %c0_i32_1 = arith.constant 0 : i32
    return %c0_i32, %c0_i32_0 : i32, i32
  }
  func.func @transform_11(%arg0: i32) -> (i32, i32) {
    %c0_i32 = arith.constant 0 : i32
    %c0_i32_0 = arith.constant 0 : i32
    %c0_i32_1 = arith.constant 0 : i32
    return %c0_i32, %c0_i32_0 : i32, i32
  }
  func.func @transform_12(%arg0: i32) -> (i32, i32) {
    %c0_i32 = arith.constant 0 : i32
    %c0_i32_0 = arith.constant 0 : i32
    return %arg0, %c0_i32 : i32, i32
  }
  func.func @transform_13(%arg0: i32) -> (i32, i32) {
    %c0_i32 = arith.constant 0 : i32
    %c0_i32_0 = arith.constant 0 : i32
    return %arg0, %c0_i32 : i32, i32
  }
}

</mosaic_0001>

<llo_original>
// kernel: vae_forward.1
$region0: #{vae_forward.1}
  #allocation0 [shape = 'u32[]', space=smem, size = 0x4, offset = 0x4, fixed_abs, tag = 'smem constant byte address 0x4 - core index']
  #allocation1 [shape = 'u32[144,128]{1,0:T(1,128)}', space=vmem, size = 0x12000, scoped, tag = 'internal scratch']
  %s0 = inlined_call_operand.vmem [shape: bf16[8,256], index: 0, kind: input, shape index: {}]
  %s1 = inlined_call_operand.vmem [shape: f32[8,128], index: 1, kind: input, shape index: {}]
  %s2 = inlined_call_operand.hbm [shape: bf16[256,128], index: 2, kind: input, shape index: {}]
  %s3 = inlined_call_operand.vmem [shape: f32[1,128], index: 3, kind: input, shape index: {}]
  %s4 = inlined_call_operand.vmem [shape: bf16[128,128], index: 4, kind: input, shape index: {}]
  %s5 = inlined_call_operand.hbm [shape: f32[1,128], index: 5, kind: input, shape index: {}]
  %s6 = inlined_call_operand.hbm [shape: bf16[128,128], index: 6, kind: input, shape index: {}]
  %s7 = inlined_call_operand.hbm [shape: f32[1,128], index: 7, kind: input, shape index: {}]
  %s8 = inlined_call_operand.hbm [shape: bf16[128,128], index: 8, kind: input, shape index: {}]
  %s9 = inlined_call_operand.hbm [shape: f32[1,128], index: 9, kind: input, shape index: {}]
  %s10 = inlined_call_operand.hbm [shape: bf16[128,256], index: 10, kind: input, shape index: {}]
  %s11 = inlined_call_operand.vmem [shape: f32[1,256], index: 11, kind: input, shape index: {}]
  %s12 = inlined_call_operand.hbm [shape: f32[8,256], index: 12, kind: output, shape index: {0}]
  %s13 = inlined_call_operand.vmem [shape: f32[8,128], index: 13, kind: output, shape index: {1}]
  %14 = xla_tuple %s12, %s13
  %s15 = sld [smem:[#allocation0]]
  $region94: #{vae_forward.1} parent=0
    _
  %s17 = ssub.s32 1, %s15
  %s18 = scalar_select 0, %s17, %s15
  $region1: #{vae_forward.1} parent=0
    #allocation2 [shape = 'u8[65536]{0}', space=vmem, size = 0x10000, scoped, tag = 'input window, operand 2, single buffered']
    #allocation3 [shape = 's32[1]{0}', space=sflag, size = 0x4, scoped, tag = 'scoped memory for vae_forward.1']
    #allocation4 [shape = 's32[1]{0}', space=sflag, size = 0x4, scoped, tag = 'scoped memory for vae_forward.1']
    #allocation5 [shape = 'u8[512]{0}', space=vmem, size = 0x400, scoped, tag = 'input window, operand 5, single buffered']
    #allocation6 [shape = 's32[1]{0}', space=sflag, size = 0x4, scoped, tag = 'scoped memory for vae_forward.1']
    #allocation7 [shape = 'u8[32768]{0}', space=vmem, size = 0x8000, scoped, tag = 'input window, operand 6, single buffered']
    #allocation8 [shape = 'u8[512]{0}', space=vmem, size = 0x400, scoped, tag = 'input window, operand 7, single buffered']
    #allocation9 [shape = 's32[1]{0}', space=sflag, size = 0x4, scoped, tag = 'scoped memory for vae_forward.1']
    #allocation10 [shape = 'u8[32768]{0}', space=vmem, size = 0x8000, scoped, tag = 'input window, operand 8, single buffered']
    #allocation11 [shape = 'u8[512]{0}', space=vmem, size = 0x400, scoped, tag = 'input window, operand 9, single buffered']
    #allocation12 [shape = 's32[1]{0}', space=sflag, size = 0x4, scoped, tag = 'scoped memory for vae_forward.1']
    #allocation13 [shape = 'u8[65536]{0}', space=vmem, size = 0x10000, scoped, tag = 'input window, operand 10, single buffered']
    #allocation14 [shape = 'u8[8192]{0}', space=vmem, size = 0x2000, scoped, tag = 'output window, operand 0, single buffered']
    %19 = vsyncpa [#allocation3], 0
    %20 = vsyncpa [#allocation6], 0
    %21 = vsyncpa [#allocation9], 0
    %22 = vsyncpa [#allocation12], 0
    %23 = vsyncpa [#allocation4], 0
    // Predicated region
    $region2: #{vae_forward.1} parent=1 // pred_check
      _
    $region3: #{vae_forward.1} parent=1 // pred_check_branch
      %25 = sbr.rel (0) target = $region5
    $region4: #{vae_forward.1} parent=1 // pred_region
      _
    $region5: #{vae_forward.1} parent=1 // pred_fallthru
      _
    // Predicated region
    $region6: #{vae_forward.1} parent=1 // pred_check
      _
    $region7: #{vae_forward.1} parent=1 // pred_check_branch
      %27 = sbr.rel (0) target = $region9
    $region8: #{vae_forward.1} parent=1 // pred_region
      _
    $region9: #{vae_forward.1} parent=1 // pred_fallthru
      _
    // Predicated region
    $region10: #{vae_forward.1} parent=1 // pred_check
      _
    $region11: #{vae_forward.1} parent=1 // pred_check_branch
      %29 = sbr.rel (0) target = $region13
    $region12: #{vae_forward.1} parent=1 // pred_region
      %s31 = ssub.s32 2048, 2048
      %32 = vsyncadd [#allocation3], %s31
      %s33 = sshll.u32 [#allocation2], 4
      %s34 = int_to_ptr.vmem [resolvable:$true] %s33
      %39 = dma.hbm_to_vmem [thread:$0]  %s2, 2048, %s34, [#allocation3], 64, 64, 4
    $region13: #{vae_forward.1} parent=1 // pred_fallthru
      _
    // Predicated region
    $region14: #{vae_forward.1} parent=1 // pred_check
      _
    $region15: #{vae_forward.1} parent=1 // pred_check_branch
      %41 = sbr.rel (0) target = $region17
    $region16: #{vae_forward.1} parent=1 // pred_region
      _
    $region17: #{vae_forward.1} parent=1 // pred_fallthru
      _
    // Predicated region
    $region18: #{vae_forward.1} parent=1 // pred_check
      _
    $region19: #{vae_forward.1} parent=1 // pred_check_branch
      %43 = sbr.rel (0) target = $region21
    $region20: #{vae_forward.1} parent=1 // pred_region
      _
    $region21: #{vae_forward.1} parent=1 // pred_fallthru
      _
    // Predicated region
    $region22: #{vae_forward.1} parent=1 // pred_check
      _
    $region23: #{vae_forward.1} parent=1 // pred_check_branch
      %45 = sbr.rel (0) target = $region25
    $region24: #{vae_forward.1} parent=1 // pred_region
      %s47 = ssub.s32 16, 16
      %48 = vsyncadd [#allocation6], %s47
      %s50 = sshll.u32 [#allocation5], 4
      %s51 = int_to_ptr.vmem [resolvable:$true] %s50
      %53 = dma.hbm_to_vmem [thread:$0]  %s5, 16, %s51, [#allocation6]
    $region25: #{vae_forward.1} parent=1 // pred_fallthru
      _
    // Predicated region
    $region26: #{vae_forward.1} parent=1 // pred_check
      _
    $region27: #{vae_forward.1} parent=1 // pred_check_branch
      %55 = sbr.rel (0) target = $region29
    $region28: #{vae_forward.1} parent=1 // pred_region
      %s57 = ssub.s32 1024, 1024
      %58 = vsyncadd [#allocation6], %s57
      %s59 = sshll.u32 [#allocation7], 4
      %s60 = int_to_ptr.vmem [resolvable:$true] %s59
      %65 = dma.hbm_to_vmem [thread:$0]  %s6, 1024, %s60, [#allocation6], 64, 64, 4
    $region29: #{vae_forward.1} parent=1 // pred_fallthru
      _
    // Predicated region
    $region30: #{vae_forward.1} parent=1 // pred_check
      _
    $region31: #{vae_forward.1} parent=1 // pred_check_branch
      %67 = sbr.rel (0) target = $region33
    $region32: #{vae_forward.1} parent=1 // pred_region
      %s69 = ssub.s32 16, 16
      %70 = vsyncadd [#allocation9], %s69
      %s72 = sshll.u32 [#allocation8], 4
      %s73 = int_to_ptr.vmem [resolvable:$true] %s72
      %75 = dma.hbm_to_vmem [thread:$0]  %s7, 16, %s73, [#allocation9]
    $region33: #{vae_forward.1} parent=1 // pred_fallthru
      _
    // Predicated region
    $region34: #{vae_forward.1} parent=1 // pred_check
      _
    $region35: #{vae_forward.1} parent=1 // pred_check_branch
      %77 = sbr.rel (0) target = $region37
    $region36: #{vae_forward.1} parent=1 // pred_region
      %s79 = ssub.s32 1024, 1024
      %80 = vsyncadd [#allocation9], %s79
      %s81 = sshll.u32 [#allocation10], 4
      %s82 = int_to_ptr.vmem [resolvable:$true] %s81
      %87 = dma.hbm_to_vmem [thread:$0]  %s8, 1024, %s82, [#allocation9], 64, 64, 4
    $region37: #{vae_forward.1} parent=1 // pred_fallthru
      _
    // Predicated region
    $region38: #{vae_forward.1} parent=1 // pred_check
      _
    $region39: #{vae_forward.1} parent=1 // pred_check_branch
      %89 = sbr.rel (0) target = $region41
    $region40: #{vae_forward.1} parent=1 // pred_region
      %s91 = ssub.s32 16, 16
      %92 = vsyncadd [#allocation12], %s91
      %s94 = sshll.u32 [#allocation11], 4
      %s95 = int_to_ptr.vmem [resolvable:$true] %s94
      %97 = dma.hbm_to_vmem [thread:$0]  %s9, 16, %s95, [#allocation12]
    $region41: #{vae_forward.1} parent=1 // pred_fallthru
      _
    // Predicated region
    $region42: #{vae_forward.1} parent=1 // pred_check
      _
    $region43: #{vae_forward.1} parent=1 // pred_check_branch
      %99 = sbr.rel (0) target = $region45
    $region44: #{vae_forward.1} parent=1 // pred_region
      %s101 = ssub.s32 2048, 2048
      %102 = vsyncadd [#allocation12], %s101
      %s103 = sshll.u32 [#allocation13], 4
      %s104 = int_to_ptr.vmem [resolvable:$true] %s103
      %109 = dma.hbm_to_vmem [thread:$0]  %s10, 2048, %s104, [#allocation12], 128, 128, 8
    $region45: #{vae_forward.1} parent=1 // pred_fallthru
      _
    // Predicated region
    $region46: #{vae_forward.1} parent=1 // pred_check
      _
    $region47: #{vae_forward.1} parent=1 // pred_check_branch
      %111 = sbr.rel (0) target = $region49
    $region48: #{vae_forward.1} parent=1 // pred_region
      _
    $region49: #{vae_forward.1} parent=1 // pred_fallthru
      _
    // Predicated region
    $region50: #{vae_forward.1} parent=1 // pred_check
      _
    $region51: #{vae_forward.1} parent=1 // pred_check_branch
      %113 = sbr.rel (0) target = $region53
    $region52: #{vae_forward.1} parent=1 // pred_region
      %114 = dma.done [#allocation3], 2048
    $region53: #{vae_forward.1} parent=1 // pred_fallthru
      _
    // Predicated region
    $region54: #{vae_forward.1} parent=1 // pred_check
      _
    $region55: #{vae_forward.1} parent=1 // pred_check_branch
      %116 = sbr.rel (0) target = $region57
    $region56: #{vae_forward.1} parent=1 // pred_region
      %117 = dma.done [#allocation6], 16
    $region57: #{vae_forward.1} parent=1 // pred_fallthru
      _
    // Predicated region
    $region58: #{vae_forward.1} parent=1 // pred_check
      _
    $region59: #{vae_forward.1} parent=1 // pred_check_branch
      %119 = sbr.rel (0) target = $region61
    $region60: #{vae_forward.1} parent=1 // pred_region
      %120 = dma.done [#allocation6], 1024
    $region61: #{vae_forward.1} parent=1 // pred_fallthru
      _
    // Predicated region
    $region62: #{vae_forward.1} parent=1 // pred_check
      _
    $region63: #{vae_forward.1} parent=1 // pred_check_branch
      %122 = sbr.rel (0) target = $region65
    $region64: #{vae_forward.1} parent=1 // pred_region
      %123 = dma.done [#allocation9], 16
    $region65: #{vae_forward.1} parent=1 // pred_fallthru
      _
    // Predicated region
    $region66: #{vae_forward.1} parent=1 // pred_check
      _
    $region67: #{vae_forward.1} parent=1 // pred_check_branch
      %125 = sbr.rel (0) target = $region69
    $region68: #{vae_forward.1} parent=1 // pred_region
      %126 = dma.done [#allocation9], 1024
    $region69: #{vae_forward.1} parent=1 // pred_fallthru
      _
    // Predicated region
    $region70: #{vae_forward.1} parent=1 // pred_check
      _
    $region71: #{vae_forward.1} parent=1 // pred_check_branch
      %128 = sbr.rel (0) target = $region73
    $region72: #{vae_forward.1} parent=1 // pred_region
      %129 = dma.done [#allocation12], 16
    $region73: #{vae_forward.1} parent=1 // pred_fallthru
      _
    // Predicated region
    $region74: #{vae_forward.1} parent=1 // pred_check
      _
    $region75: #{vae_forward.1} parent=1 // pred_check_branch
      %131 = sbr.rel (0) target = $region77
    $region76: #{vae_forward.1} parent=1 // pred_region
      %132 = dma.done [#allocation12], 2048
    $region77: #{vae_forward.1} parent=1 // pred_fallthru
      _
    %v134 = vld [vmem:[%s0] sm:$0xff]
    %v135 = vld [vmem:[#allocation2] sm:$0xf]
    %v136 = vld [vmem:[#allocation2 + $0x4] sm:$0xf]
    %v137 = vld [vmem:[#allocation2 + $0x8] sm:$0xf]
    %v138 = vld [vmem:[#allocation2 + $0xc] sm:$0xf]
    %v139 = vld [vmem:[#allocation2 + $0x10] sm:$0xf]
    %v140 = vld [vmem:[#allocation2 + $0x14] sm:$0xf]
    %v141 = vld [vmem:[#allocation2 + $0x18] sm:$0xf]
    %v142 = vld [vmem:[#allocation2 + $0x1c] sm:$0xf]
    %v143 = vld [vmem:[#allocation2 + $0x20] sm:$0xf]
    %v144 = vld [vmem:[#allocation2 + $0x24] sm:$0xf]
    %v145 = vld [vmem:[#allocation2 + $0x28] sm:$0xf]
    %v146 = vld [vmem:[#allocation2 + $0x2c] sm:$0xf]
    %v147 = vld [vmem:[#allocation2 + $0x30] sm:$0xf]
    %v148 = vld [vmem:[#allocation2 + $0x34] sm:$0xf]
    %v149 = vld [vmem:[#allocation2 + $0x38] sm:$0xf]
    %v150 = vld [vmem:[#allocation2 + $0x3c] sm:$0xf]
    %v151 = vld [vmem:[#allocation2 + $0x40] sm:$0xf]
    %v152 = vld [vmem:[#allocation2 + $0x44] sm:$0xf]
    %v153 = vld [vmem:[#allocation2 + $0x48] sm:$0xf]
    %v154 = vld [vmem:[#allocation2 + $0x4c] sm:$0xf]
    %v155 = vld [vmem:[#allocation2 + $0x50] sm:$0xf]
    %v156 = vld [vmem:[#allocation2 + $0x54] sm:$0xf]
    %v157 = vld [vmem:[#allocation2 + $0x58] sm:$0xf]
    %v158 = vld [vmem:[#allocation2 + $0x5c] sm:$0xf]
    %v159 = vld [vmem:[#allocation2 + $0x60] sm:$0xf]
    %v160 = vld [vmem:[#allocation2 + $0x64] sm:$0xf]
    %v161 = vld [vmem:[#allocation2 + $0x68] sm:$0xf]
    %v162 = vld [vmem:[#allocation2 + $0x6c] sm:$0xf]
    %v163 = vld [vmem:[#allocation2 + $0x70] sm:$0xf]
    %v164 = vld [vmem:[#allocation2 + $0x74] sm:$0xf]
    %v165 = vld [vmem:[#allocation2 + $0x78] sm:$0xf]
    %v166 = vld [vmem:[#allocation2 + $0x7c] sm:$0xf]
    %v167 = vld [vmem:[%s3] sm:$0x1]
    %v169 = vlaneseq
    %v170 = vshrl.u32 %v169, 7
    %v171 = vsub.s32 0, %v170
    %v172 = vrot.slane %v167, %v171
    %v175 = vunpack.c.l.b16 %v134
    %v176 = vunpack.c.h.b16 %v134
    %v177 = vpack.c.b16 %v175, %v175
    %v178 = vpack.c.b16 %v176, %v176
    %v213 = vunpack.c.l.b16 %v135
    %v214 = vunpack.c.l.b16 %v136
    %v215 = vunpack.c.l.b16 %v137
    %v216 = vunpack.c.l.b16 %v138
    %v217 = vunpack.c.l.b16 %v139
    %v218 = vunpack.c.l.b16 %v140
    %v219 = vunpack.c.l.b16 %v141
    %v220 = vunpack.c.l.b16 %v142
    %v221 = vunpack.c.l.b16 %v143
    %v222 = vunpack.c.l.b16 %v144
    %v223 = vunpack.c.l.b16 %v145
    %v224 = vunpack.c.l.b16 %v146
    %v225 = vunpack.c.l.b16 %v147
    %v226 = vunpack.c.l.b16 %v148
    %v227 = vunpack.c.l.b16 %v149
    %v228 = vunpack.c.l.b16 %v150
    %v229 = vunpack.c.l.b16 %v151
    %v230 = vunpack.c.l.b16 %v152
    %v231 = vunpack.c.l.b16 %v153
    %v232 = vunpack.c.l.b16 %v154
    %v233 = vunpack.c.l.b16 %v155
    %v234 = vunpack.c.l.b16 %v156
    %v235 = vunpack.c.l.b16 %v157
    %v236 = vunpack.c.l.b16 %v158
    %v237 = vunpack.c.l.b16 %v159
    %v238 = vunpack.c.l.b16 %v160
    %v239 = vunpack.c.l.b16 %v161
    %v240 = vunpack.c.l.b16 %v162
    %v241 = vunpack.c.l.b16 %v163
    %v242 = vunpack.c.l.b16 %v164
    %v243 = vunpack.c.l.b16 %v165
    %v244 = vunpack.c.l.b16 %v166
    %v245 = vpack.c.b16 %v214, %v213
    %v246 = vpack.c.b16 %v216, %v215
    %v247 = vpack.c.b16 %v218, %v217
    %v248 = vpack.c.b16 %v220, %v219
    %v249 = vpack.c.b16 %v222, %v221
    %v250 = vpack.c.b16 %v224, %v223
    %v251 = vpack.c.b16 %v226, %v225
    %v252 = vpack.c.b16 %v228, %v227
    %v253 = vpack.c.b16 %v230, %v229
    %v254 = vpack.c.b16 %v232, %v231
    %v255 = vpack.c.b16 %v234, %v233
    %v256 = vpack.c.b16 %v236, %v235
    %v257 = vpack.c.b16 %v238, %v237
    %v258 = vpack.c.b16 %v240, %v239
    %v259 = vpack.c.b16 %v242, %v241
    %v260 = vpack.c.b16 %v244, %v243
    %277 = vmatprep.subr.bf16.mxu0 0
    %278 = vmatpush1.bf16.msra.mxu0 %v245
    %279 = vmatprep.subr.bf16.mxu0 0
    %280 = vmatpush1.bf16.msra.mxu0 %v246
    %281 = vmatprep.subr.bf16.mxu0 0
    %282 = vmatpush1.bf16.msra.mxu0 %v247
    %283 = vmatprep.subr.bf16.mxu0 0
    %284 = vmatpush1.bf16.msra.mxu0 %v248
    %285 = vmatprep.subr.bf16.mxu0 0
    %286 = vmatpush1.bf16.msra.mxu0 %v249
    %287 = vmatprep.subr.bf16.mxu0 0
    %288 = vmatpush1.bf16.msra.mxu0 %v250
    %289 = vmatprep.subr.bf16.mxu0 0
    %290 = vmatpush1.bf16.msra.mxu0 %v251
    %291 = vmatprep.subr.bf16.mxu0 0
    %292 = vmatpush1.bf16.msra.mxu0 %v252
    %293 = vmatprep.subr.bf16.mxu0 0
    %294 = vmatpush1.bf16.msra.mxu0 %v253
    %295 = vmatprep.subr.bf16.mxu0 0
    %296 = vmatpush1.bf16.msra.mxu0 %v254
    %297 = vmatprep.subr.bf16.mxu0 0
    %298 = vmatpush1.bf16.msra.mxu0 %v255
    %299 = vmatprep.subr.bf16.mxu0 0
    %300 = vmatpush1.bf16.msra.mxu0 %v256
    %301 = vmatprep.subr.bf16.mxu0 0
    %302 = vmatpush1.bf16.msra.mxu0 %v257
    %303 = vmatprep.subr.bf16.mxu0 0
    %304 = vmatpush1.bf16.msra.mxu0 %v258
    %305 = vmatprep.subr.bf16.mxu0 0
    %306 = vmatpush1.bf16.msra.mxu0 %v259
    %307 = vmatprep.subr.bf16.mxu0 0
    %308 = vmatpush1.bf16.msra.mxu0 %v260
    %309 = vmatprep.mubr.bf16.mxu0 %v178
    %310 = vmatmul.mubr.bf16.gmra.mrb[0].mxu0 %v177
    %v311 = vpop.f32.mrb[0].mxu0
    %v312 = vadd.f32 %v172, %v311
    %v313 = vpop.f32.mrb[0].mxu0
    %v314 = vpop.f32.mrb[0].mxu0
    %v315 = vpop.f32.mrb[0].mxu0
    %316 = vdwg.mxu0
    %v317 = vmax.f32 %v312, 0.0
    %v318 = vpack.c.bf16 %v317, %v317
    %v319 = vld [vmem:[%s4] sm:$0xf]
    %v320 = vld [vmem:[%s4 + $0x4] sm:$0xf]
    %v321 = vld [vmem:[%s4 + $0x8] sm:$0xf]
    %v322 = vld [vmem:[%s4 + $0xc] sm:$0xf]
    %v323 = vld [vmem:[%s4 + $0x10] sm:$0xf]
    %v324 = vld [vmem:[%s4 + $0x14] sm:$0xf]
    %v325 = vld [vmem:[%s4 + $0x18] sm:$0xf]
    %v326 = vld [vmem:[%s4 + $0x1c] sm:$0xf]
    %v327 = vld [vmem:[%s4 + $0x20] sm:$0xf]
    %v328 = vld [vmem:[%s4 + $0x24] sm:$0xf]
    %v329 = vld [vmem:[%s4 + $0x28] sm:$0xf]
    %v330 = vld [vmem:[%s4 + $0x2c] sm:$0xf]
    %v331 = vld [vmem:[%s4 + $0x30] sm:$0xf]
    %v332 = vld [vmem:[%s4 + $0x34] sm:$0xf]
    %v333 = vld [vmem:[%s4 + $0x38] sm:$0xf]
    %v334 = vld [vmem:[%s4 + $0x3c] sm:$0xf]
    %v335 = vld [vmem:[#allocation5] sm:$0x1]
    %v337 = vlaneseq
    %v338 = vshrl.u32 %v337, 7
    %v339 = vsub.s32 0, %v338
    %v340 = vrot.slane %v335, %v339
    %v358 = vunpack.c.l.b16 %v319
    %v359 = vunpack.c.l.b16 %v320
    %v360 = vunpack.c.l.b16 %v321
    %v361 = vunpack.c.l.b16 %v322
    %v362 = vunpack.c.l.b16 %v323
    %v363 = vunpack.c.l.b16 %v324
    %v364 = vunpack.c.l.b16 %v325
    %v365 = vunpack.c.l.b16 %v326
    %v366 = vunpack.c.l.b16 %v327
    %v367 = vunpack.c.l.b16 %v328
    %v368 = vunpack.c.l.b16 %v329
    %v369 = vunpack.c.l.b16 %v330
    %v370 = vunpack.c.l.b16 %v331
    %v371 = vunpack.c.l.b16 %v332
    %v372 = vunpack.c.l.b16 %v333
    %v373 = vunpack.c.l.b16 %v334
    %v374 = vpack.c.b16 %v359, %v358
    %v375 = vpack.c.b16 %v361, %v360
    %v376 = vpack.c.b16 %v363, %v362
    %v377 = vpack.c.b16 %v365, %v364
    %v378 = vpack.c.b16 %v367, %v366
    %v379 = vpack.c.b16 %v369, %v368
    %v380 = vpack.c.b16 %v371, %v370
    %v381 = vpack.c.b16 %v373, %v372
    %390 = vmatprep.subr.bf16.mxu0 0
    %391 = vmatpush1.bf16.msra.mxu0 %v374
    %392 = vmatprep.subr.bf16.mxu0 0
    %393 = vmatpush1.bf16.msra.mxu0 %v375
    %394 = vmatprep.subr.bf16.mxu0 0
    %395 = vmatpush1.bf16.msra.mxu0 %v376
    %396 = vmatprep.subr.bf16.mxu0 0
    %397 = vmatpush1.bf16.msra.mxu0 %v377
    %398 = vmatprep.subr.bf16.mxu0 0
    %399 = vmatpush1.bf16.msra.mxu0 %v378
    %400 = vmatprep.subr.bf16.mxu0 0
    %401 = vmatpush1.bf16.msra.mxu0 %v379
    %402 = vmatprep.subr.bf16.mxu0 0
    %403 = vmatpush1.bf16.msra.mxu0 %v380
    %404 = vmatprep.subr.bf16.mxu0 0
    %405 = vmatpush1.bf16.msra.mxu0 %v381
    %406 = vmatprep.subr.bf16.mxu0 0
    %407 = vmatpush1.bf16.msra.mxu0 0
    %408 = vmatprep.subr.bf16.mxu0 0
    %409 = vmatpush1.bf16.msra.mxu0 0
    %410 = vmatprep.subr.bf16.mxu0 0
    %411 = vmatpush1.bf16.msra.mxu0 0
    %412 = vmatprep.subr.bf16.mxu0 0
    %413 = vmatpush1.bf16.msra.mxu0 0
    %414 = vmatprep.subr.bf16.mxu0 0
    %415 = vmatpush1.bf16.msra.mxu0 0
    %416 = vmatprep.subr.bf16.mxu0 0
    %417 = vmatpush1.bf16.msra.mxu0 0
    %418 = vmatprep.subr.bf16.mxu0 0
    %419 = vmatpush1.bf16.msra.mxu0 0
    %420 = vmatprep.subr.bf16.mxu0 0
    %421 = vmatpush1.bf16.msra.mxu0 0
    %422 = vmatprep.mubr.bf16.mxu0 0
    %423 = vmatmul.mubr.bf16.gmra.mrb[0].mxu0 %v318
    %v424 = vpop.f32.mrb[0].mxu0
    %v425 = vadd.f32 %v340, %v424
    %v426 = vpop.f32.mrb[0].mxu0
    %v427 = vpop.f32.mrb[0].mxu0
    %v428 = vpop.f32.mrb[0].mxu0
    %429 = vdwg.mxu0
    %v430 = vmax.f32 %v425, 0.0
    %v431 = vpack.c.bf16 %v430, %v430
    %v432 = vld [vmem:[#allocation7] sm:$0xf]
    %v433 = vld [vmem:[#allocation7 + $0x4] sm:$0xf]
    %v434 = vld [vmem:[#allocation7 + $0x8] sm:$0xf]
    %v435 = vld [vmem:[#allocation7 + $0xc] sm:$0xf]
    %v436 = vld [vmem:[#allocation7 + $0x10] sm:$0xf]
    %v437 = vld [vmem:[#allocation7 + $0x14] sm:$0xf]
    %v438 = vld [vmem:[#allocation7 + $0x18] sm:$0xf]
    %v439 = vld [vmem:[#allocation7 + $0x1c] sm:$0xf]
    %v440 = vld [vmem:[#allocation7 + $0x20] sm:$0xf]
    %v441 = vld [vmem:[#allocation7 + $0x24] sm:$0xf]
    %v442 = vld [vmem:[#allocation7 + $0x28] sm:$0xf]
    %v443 = vld [vmem:[#allocation7 + $0x2c] sm:$0xf]
    %v444 = vld [vmem:[#allocation7 + $0x30] sm:$0xf]
    %v445 = vld [vmem:[#allocation7 + $0x34] sm:$0xf]
    %v446 = vld [vmem:[#allocation7 + $0x38] sm:$0xf]
    %v447 = vld [vmem:[#allocation7 + $0x3c] sm:$0xf]
    %v448 = vld [vmem:[#allocation8] sm:$0x1]
    %v450 = vlaneseq
    %v451 = vshrl.u32 %v450, 7
    %v452 = vsub.s32 0, %v451
    %v453 = vrot.slane %v448, %v452
    %v471 = vunpack.c.l.b16 %v432
    %v472 = vunpack.c.l.b16 %v433
    %v473 = vunpack.c.l.b16 %v434
    %v474 = vunpack.c.l.b16 %v435
    %v475 = vunpack.c.l.b16 %v436
    %v476 = vunpack.c.l.b16 %v437
    %v477 = vunpack.c.l.b16 %v438
    %v478 = vunpack.c.l.b16 %v439
    %v479 = vunpack.c.l.b16 %v440
    %v480 = vunpack.c.l.b16 %v441
    %v481 = vunpack.c.l.b16 %v442
    %v482 = vunpack.c.l.b16 %v443
    %v483 = vunpack.c.l.b16 %v444
    %v484 = vunpack.c.l.b16 %v445
    %v485 = vunpack.c.l.b16 %v446
    %v486 = vunpack.c.l.b16 %v447
    %v487 = vpack.c.b16 %v472, %v471
    %v488 = vpack.c.b16 %v474, %v473
    %v489 = vpack.c.b16 %v476, %v475
    %v490 = vpack.c.b16 %v478, %v477
    %v491 = vpack.c.b16 %v480, %v479
    %v492 = vpack.c.b16 %v482, %v481
    %v493 = vpack.c.b16 %v484, %v483
    %v494 = vpack.c.b16 %v486, %v485
    %503 = vmatprep.subr.bf16.mxu0 0
    %504 = vmatpush1.bf16.msra.mxu0 %v487
    %505 = vmatprep.subr.bf16.mxu0 0
    %506 = vmatpush1.bf16.msra.mxu0 %v488
    %507 = vmatprep.subr.bf16.mxu0 0
    %508 = vmatpush1.bf16.msra.mxu0 %v489
    %509 = vmatprep.subr.bf16.mxu0 0
    %510 = vmatpush1.bf16.msra.mxu0 %v490
    %511 = vmatprep.subr.bf16.mxu0 0
    %512 = vmatpush1.bf16.msra.mxu0 %v491
    %513 = vmatprep.subr.bf16.mxu0 0
    %514 = vmatpush1.bf16.msra.mxu0 %v492
    %515 = vmatprep.subr.bf16.mxu0 0
    %516 = vmatpush1.bf16.msra.mxu0 %v493
    %517 = vmatprep.subr.bf16.mxu0 0
    %518 = vmatpush1.bf16.msra.mxu0 %v494
    %519 = vmatprep.subr.bf16.mxu0 0
    %520 = vmatpush1.bf16.msra.mxu0 0
    %521 = vmatprep.subr.bf16.mxu0 0
    %522 = vmatpush1.bf16.msra.mxu0 0
    %523 = vmatprep.subr.bf16.mxu0 0
    %524 = vmatpush1.bf16.msra.mxu0 0
    %525 = vmatprep.subr.bf16.mxu0 0
    %526 = vmatpush1.bf16.msra.mxu0 0
    %527 = vmatprep.subr.bf16.mxu0 0
    %528 = vmatpush1.bf16.msra.mxu0 0
    %529 = vmatprep.subr.bf16.mxu0 0
    %530 = vmatpush1.bf16.msra.mxu0 0
    %531 = vmatprep.subr.bf16.mxu0 0
    %532 = vmatpush1.bf16.msra.mxu0 0
    %533 = vmatprep.subr.bf16.mxu0 0
    %534 = vmatpush1.bf16.msra.mxu0 0
    %535 = vmatprep.mubr.bf16.mxu0 0
    %536 = vmatmul.mubr.bf16.gmra.mrb[0].mxu0 %v431
    %v537 = vpop.f32.mrb[0].mxu0
    %v538 = vadd.f32 %v453, %v537
    %v539 = vpop.f32.mrb[0].mxu0
    %v540 = vpop.f32.mrb[0].mxu0
    %v541 = vpop.f32.mrb[0].mxu0
    %542 = vdwg.mxu0
    %543 = vst [vmem:[%s13] sm:$0xff] %v538
    %544 = vrot.lane.b32.xlu0 %v538, 64
    %v545 = vpop.permute.xlu0 %544
    %v546 = vmul.f32 %v545, 0.5
    %v547 = vmul.f32 %v546, 1.442695
    %v548 = vpow.pop %v547
    %v549 = vld [vmem:[%s1] sm:$0xff]
    %v550 = vmul.f32 %v548, %v549
    %v551 = vadd.f32 %v538, %v550
    %v552 = vpack.c.bf16 %v551, %v551
    %v553 = vld [vmem:[#allocation10] sm:$0xf]
    %v554 = vld [vmem:[#allocation10 + $0x4] sm:$0xf]
    %v555 = vld [vmem:[#allocation10 + $0x8] sm:$0xf]
    %v556 = vld [vmem:[#allocation10 + $0xc] sm:$0xf]
    %v557 = vld [vmem:[#allocation10 + $0x10] sm:$0xf]
    %v558 = vld [vmem:[#allocation10 + $0x14] sm:$0xf]
    %v559 = vld [vmem:[#allocation10 + $0x18] sm:$0xf]
    %v560 = vld [vmem:[#allocation10 + $0x1c] sm:$0xf]
    %v561 = vld [vmem:[#allocation10 + $0x20] sm:$0xf]
    %v562 = vld [vmem:[#allocation10 + $0x24] sm:$0xf]
    %v563 = vld [vmem:[#allocation10 + $0x28] sm:$0xf]
    %v564 = vld [vmem:[#allocation10 + $0x2c] sm:$0xf]
    %v565 = vld [vmem:[#allocation10 + $0x30] sm:$0xf]
    %v566 = vld [vmem:[#allocation10 + $0x34] sm:$0xf]
    %v567 = vld [vmem:[#allocation10 + $0x38] sm:$0xf]
    %v568 = vld [vmem:[#allocation10 + $0x3c] sm:$0xf]
    %v569 = vld [vmem:[#allocation11] sm:$0x1]
    %v571 = vlaneseq
    %v572 = vshrl.u32 %v571, 7
    %v573 = vsub.s32 0, %v572
    %v574 = vrot.slane %v569, %v573
    %v592 = vunpack.c.l.b16 %v553
    %v593 = vunpack.c.l.b16 %v554
    %v594 = vunpack.c.l.b16 %v555
    %v595 = vunpack.c.l.b16 %v556
    %v596 = vunpack.c.l.b16 %v557
    %v597 = vunpack.c.l.b16 %v558
    %v598 = vunpack.c.l.b16 %v559
    %v599 = vunpack.c.l.b16 %v560
    %v600 = vunpack.c.l.b16 %v561
    %v601 = vunpack.c.l.b16 %v562
    %v602 = vunpack.c.l.b16 %v563
    %v603 = vunpack.c.l.b16 %v564
    %v604 = vunpack.c.l.b16 %v565
    %v605 = vunpack.c.l.b16 %v566
    %v606 = vunpack.c.l.b16 %v567
    %v607 = vunpack.c.l.b16 %v568
    %v608 = vpack.c.b16 %v593, %v592
    %v609 = vpack.c.b16 %v595, %v594
    %v610 = vpack.c.b16 %v597, %v596
    %v611 = vpack.c.b16 %v599, %v598
    %v612 = vpack.c.b16 %v601, %v600
    %v613 = vpack.c.b16 %v603, %v602
    %v614 = vpack.c.b16 %v605, %v604
    %v615 = vpack.c.b16 %v607, %v606
    %624 = vmatprep.subr.bf16.mxu0 0
    %625 = vmatpush1.bf16.msra.mxu0 %v608
    %626 = vmatprep.subr.bf16.mxu0 0
    %627 = vmatpush1.bf16.msra.mxu0 %v609
    %628 = vmatprep.subr.bf16.mxu0 0
    %629 = vmatpush1.bf16.msra.mxu0 %v610
    %630 = vmatprep.subr.bf16.mxu0 0
    %631 = vmatpush1.bf16.msra.mxu0 %v611
    %632 = vmatprep.subr.bf16.mxu0 0
    %633 = vmatpush1.bf16.msra.mxu0 %v612
    %634 = vmatprep.subr.bf16.mxu0 0
    %635 = vmatpush1.bf16.msra.mxu0 %v613
    %636 = vmatprep.subr.bf16.mxu0 0
    %637 = vmatpush1.bf16.msra.mxu0 %v614
    %638 = vmatprep.subr.bf16.mxu0 0
    %639 = vmatpush1.bf16.msra.mxu0 %v615
    %640 = vmatprep.subr.bf16.mxu0 0
    %641 = vmatpush1.bf16.msra.mxu0 0
    %642 = vmatprep.subr.bf16.mxu0 0
    %643 = vmatpush1.bf16.msra.mxu0 0
    %644 = vmatprep.subr.bf16.mxu0 0
    %645 = vmatpush1.bf16.msra.mxu0 0
    %646 = vmatprep.subr.bf16.mxu0 0
    %647 = vmatpush1.bf16.msra.mxu0 0
    %648 = vmatprep.subr.bf16.mxu0 0
    %649 = vmatpush1.bf16.msra.mxu0 0
    %650 = vmatprep.subr.bf16.mxu0 0
    %651 = vmatpush1.bf16.msra.mxu0 0
    %652 = vmatprep.subr.bf16.mxu0 0
    %653 = vmatpush1.bf16.msra.mxu0 0
    %654 = vmatprep.subr.bf16.mxu0 0
    %655 = vmatpush1.bf16.msra.mxu0 0
    %656 = vmatprep.mubr.bf16.mxu0 0
    %657 = vmatmul.mubr.bf16.gmra.mrb[0].mxu0 %v552
    %v658 = vpop.f32.mrb[0].mxu0
    %v659 = vadd.f32 %v574, %v658
    %v660 = vpop.f32.mrb[0].mxu0
    %v661 = vpop.f32.mrb[0].mxu0
    %v662 = vpop.f32.mrb[0].mxu0
    %663 = vdwg.mxu0
    %v664 = vmax.f32 %v659, 0.0
    %v665 = vpack.c.bf16 %v664, %v664
    %v666 = vld [vmem:[#allocation13] sm:$0xff]
    %v667 = vld [vmem:[#allocation13 + $0x8] sm:$0xff]
    %v668 = vld [vmem:[#allocation13 + $0x10] sm:$0xff]
    %v669 = vld [vmem:[#allocation13 + $0x18] sm:$0xff]
    %v670 = vld [vmem:[#allocation13 + $0x20] sm:$0xff]
    %v671 = vld [vmem:[#allocation13 + $0x28] sm:$0xff]
    %v672 = vld [vmem:[#allocation13 + $0x30] sm:$0xff]
    %v673 = vld [vmem:[#allocation13 + $0x38] sm:$0xff]
    %v674 = vld [vmem:[#allocation13 + $0x40] sm:$0xff]
    %v675 = vld [vmem:[#allocation13 + $0x48] sm:$0xff]
    %v676 = vld [vmem:[#allocation13 + $0x50] sm:$0xff]
    %v677 = vld [vmem:[#allocation13 + $0x58] sm:$0xff]
    %v678 = vld [vmem:[#allocation13 + $0x60] sm:$0xff]
    %v679 = vld [vmem:[#allocation13 + $0x68] sm:$0xff]
    %v680 = vld [vmem:[#allocation13 + $0x70] sm:$0xff]
    %v681 = vld [vmem:[#allocation13 + $0x78] sm:$0xff]
    %v682 = vld [vmem:[%s11] sm:$0x3]
    %v684 = vlaneseq
    %v685 = vshrl.u32 %v684, 7
    %v686 = vsub.s32 0, %v685
    %v687 = vrot.slane %v682, %v686
    %v688 = vlaneseq
    %v689 = vshrl.u32 %v688, 7
    %v690 = vsub.s32 1, %v689
    %v691 = vrot.slane %v682, %v690
    %v710 = vunpack.c.l.b16 %v666
    %v711 = vunpack.c.h.b16 %v666
    %v712 = vunpack.c.l.b16 %v667
    %v713 = vunpack.c.h.b16 %v667
    %v714 = vunpack.c.l.b16 %v668
    %v715 = vunpack.c.h.b16 %v668
    %v716 = vunpack.c.l.b16 %v669
    %v717 = vunpack.c.h.b16 %v669
    %v718 = vunpack.c.l.b16 %v670
    %v719 = vunpack.c.h.b16 %v670
    %v720 = vunpack.c.l.b16 %v671
    %v721 = vunpack.c.h.b16 %v671
    %v722 = vunpack.c.l.b16 %v672
    %v723 = vunpack.c.h.b16 %v672
    %v724 = vunpack.c.l.b16 %v673
    %v725 = vunpack.c.h.b16 %v673
    %v726 = vunpack.c.l.b16 %v674
    %v727 = vunpack.c.h.b16 %v674
    %v728 = vunpack.c.l.b16 %v675
    %v729 = vunpack.c.h.b16 %v675
    %v730 = vunpack.c.l.b16 %v676
    %v731 = vunpack.c.h.b16 %v676
    %v732 = vunpack.c.l.b16 %v677
    %v733 = vunpack.c.h.b16 %v677
    %v734 = vunpack.c.l.b16 %v678
    %v735 = vunpack.c.h.b16 %v678
    %v736 = vunpack.c.l.b16 %v679
    %v737 = vunpack.c.h.b16 %v679
    %v738 = vunpack.c.l.b16 %v680
    %v739 = vunpack.c.h.b16 %v680
    %v740 = vunpack.c.l.b16 %v681
    %v741 = vunpack.c.h.b16 %v681
    %v742 = vpack.c.b16 %v712, %v710
    %v743 = vpack.c.b16 %v713, %v711
    %v744 = vpack.c.b16 %v716, %v714
    %v745 = vpack.c.b16 %v717, %v715
    %v746 = vpack.c.b16 %v720, %v718
    %v747 = vpack.c.b16 %v721, %v719
    %v748 = vpack.c.b16 %v724, %v722
    %v749 = vpack.c.b16 %v725, %v723
    %v750 = vpack.c.b16 %v728, %v726
    %v751 = vpack.c.b16 %v729, %v727
    %v752 = vpack.c.b16 %v732, %v730
    %v753 = vpack.c.b16 %v733, %v731
    %v754 = vpack.c.b16 %v736, %v734
    %v755 = vpack.c.b16 %v737, %v735
    %v756 = vpack.c.b16 %v740, %v738
    %v757 = vpack.c.b16 %v741, %v739
    %774 = vmatprep.subr.bf16.mxu0 %v743
    %775 = vmatpush1.bf16.msra.mxu0 %v742
    %776 = vmatprep.subr.bf16.mxu0 %v745
    %777 = vmatpush1.bf16.msra.mxu0 %v744
    %778 = vmatprep.subr.bf16.mxu0 %v747
    %779 = vmatpush1.bf16.msra.mxu0 %v746
    %780 = vmatprep.subr.bf16.mxu0 %v749
    %781 = vmatpush1.bf16.msra.mxu0 %v748
    %782 = vmatprep.subr.bf16.mxu0 %v751
    %783 = vmatpush1.bf16.msra.mxu0 %v750
    %784 = vmatprep.subr.bf16.mxu0 %v753
    %785 = vmatpush1.bf16.msra.mxu0 %v752
    %786 = vmatprep.subr.bf16.mxu0 %v755
    %787 = vmatpush1.bf16.msra.mxu0 %v754
    %788 = vmatprep.subr.bf16.mxu0 %v757
    %789 = vmatpush1.bf16.msra.mxu0 %v756
    %790 = vmatprep.subr.bf16.mxu0 0
    %791 = vmatpush1.bf16.msra.mxu0 0
    %792 = vmatprep.subr.bf16.mxu0 0
    %793 = vmatpush1.bf16.msra.mxu0 0
    %794 = vmatprep.subr.bf16.mxu0 0
    %795 = vmatpush1.bf16.msra.mxu0 0
    %796 = vmatprep.subr.bf16.mxu0 0
    %797 = vmatpush1.bf16.msra.mxu0 0
    %798 = vmatprep.subr.bf16.mxu0 0
    %799 = vmatpush1.bf16.msra.mxu0 0
    %800 = vmatprep.subr.bf16.mxu0 0
    %801 = vmatpush1.bf16.msra.mxu0 0
    %802 = vmatprep.subr.bf16.mxu0 0
    %803 = vmatpush1.bf16.msra.mxu0 0
    %804 = vmatprep.subr.bf16.mxu0 0
    %805 = vmatpush1.bf16.msra.mxu0 0
    %806 = vmatprep.mubr.bf16.mxu0 0
    %807 = vmatmul.mubr.bf16.gmra.mrb[0].mxu0 %v665
    %v808 = vpop.f32.mrb[0].mxu0
    %v809 = vadd.f32 %v687, %v808
    %v810 = vpop.f32.mrb[0].mxu0
    %v811 = vadd.f32 %v691, %v810
    %v812 = vpop.f32.mrb[0].mxu0
    %v813 = vpop.f32.mrb[0].mxu0
    %814 = vdwg.mxu0
    %v815 = vsub.f32 0.0, %v809
    %v816 = vsub.f32 0.0, %v811
    %v817 = vmul.f32 %v815, 1.442695
    %v818 = vpow.pop %v817
    %v819 = vmul.f32 %v816, 1.442695
    %v820 = vpow.pop %v819
    %v821 = vadd.f32 %v818, 1.0
    %v822 = vadd.f32 %v820, 1.0
    %v823 = vrcp.pop %v821
    %v824 = vrcp.pop %v822
    %825 = vst [vmem:[#allocation14] sm:$0xff] %v823
    %826 = vst [vmem:[#allocation14 + $0x8] sm:$0xff] %v824
    // Predicated region
    $region78: #{vae_forward.1} parent=1 // pred_check
      _
    $region79: #{vae_forward.1} parent=1 // pred_check_branch
      %828 = sbr.rel (0) target = $region81
    $region80: #{vae_forward.1} parent=1 // pred_region
      %s830 = ssub.s32 256, 256
      %831 = vsyncadd [#allocation4], %s830
      %s833 = sshll.u32 [#allocation14], 4
      %s834 = int_to_ptr.vmem [resolvable:$true] %s833
      %836 = dma.vmem_to_hbm [thread:$0]  %s834, 256, %s12, [#allocation4]
    $region81: #{vae_forward.1} parent=1 // pred_fallthru
      _
    // Predicated region
    $region82: #{vae_forward.1} parent=1 // pred_check
      _
    $region83: #{vae_forward.1} parent=1 // pred_check_branch
      %838 = sbr.rel (0) target = $region85
    $region84: #{vae_forward.1} parent=1 // pred_region
      _
    $region85: #{vae_forward.1} parent=1 // pred_fallthru
      _
    // Predicated region
    $region86: #{vae_forward.1} parent=1 // pred_check
      _
    $region87: #{vae_forward.1} parent=1 // pred_check_branch
      %840 = sbr.rel (0) target = $region89
    $region88: #{vae_forward.1} parent=1 // pred_region
      %841 = dma.done [#allocation4], 256
    $region89: #{vae_forward.1} parent=1 // pred_fallthru
      _
    // Predicated region
    $region90: #{vae_forward.1} parent=1 // pred_check
      _
    $region91: #{vae_forward.1} parent=1 // pred_check_branch
      %843 = sbr.rel (0) target = $region93
    $region92: #{vae_forward.1} parent=1 // pred_region
      _
    $region93: #{vae_forward.1} parent=1 // pred_fallthru
      _
    %844 = vsyncpa [#allocation3], 1
    %845 = vsyncpa [#allocation6], 1
    %846 = vsyncpa [#allocation9], 1
    %847 = vsyncpa [#allocation12], 1
    %848 = vsyncpa [#allocation4], 1

</llo_original>
